<compile_context>
chip_gen: v7x
topology: tpu7x:2x2x1
jax: 0.10.0
libtpu: 0.0.40
codegen_flags: <defaults>
</compile_context>

<pallas_src>
import math

import jax
import jax.numpy as jnp
from jax.experimental import pallas as pl
from jax.experimental.pallas import tpu as pltpu


# ------------------------------ fused kernel -------------------------------
def _make_dice_kernel(nc, TS, S, needs_mask):
    """Fused softmax + group-of-nc argmax + per-class count accumulation.

    Block views per grid step (z, si):
      x_ref   : (1, nc, TS) f32    logits, lanes = flattened spatial
      t_ref   : (1, nc, TS) int8   target class of the group of each element
      oh_ref  : (TS, nc)    bf16   one-hot of lane % nc (static, fetched once)
      out_ref : (1, 3, nc)  f32    [inter, pred, gth] accumulator per z-slice
    """
    pow2 = (nc & (nc - 1)) == 0

    def kernel(x_ref, t_ref, oh_ref, out_ref):
        si = pl.program_id(1)

        @pl.when(si == 0)
        def _init():
            out_ref[...] = jnp.zeros_like(out_ref)

        x = x_ref[0]                          # (nc, TS) f32
        t = t_ref[0].astype(jnp.int32)        # (nc, TS) int32
        oh = oh_ref[...]                      # (TS, nc) bf16

        # ---- channel softmax (matches F.softmax(dim=1)) --------------------
        m = jnp.max(x, axis=0, keepdims=True)
        e = jnp.exp(x - m)
        denom = jnp.sum(e, axis=0, keepdims=True)
        p = e / denom                         # (nc, TS)

        # lane index and position inside the group of nc consecutive elements
        lane = jax.lax.broadcasted_iota(jnp.int32, (1, TS), 1)
        if pow2:
            kp = lane & (nc - 1)
        else:
            kp = jax.lax.rem(lane, nc)

        # ---- first-occurrence argmax inside every group of nc consecutive
        #      flattened elements (the quirky .view(-1, n_classes) regroup).
        #      Earlier in-group neighbours must be beaten strictly, later ones
        #      only non-strictly (torch.argmax first-occurrence).  Because
        #      TS % nc == 0, the masks kp < r / kp >= nc - r also reject the
        #      tile-edge wraparound lanes produced by the rolls.
        is_winner = None
        for r in range(1, nc):
            prev_r = jnp.roll(p, r, axis=1)     # value at lane - r
            next_r = jnp.roll(p, -r, axis=1)    # value at lane + r
            no_prev = kp < r                    # no in-group neighbour at -r
            no_next = kp >= nc - r              # no in-group neighbour at +r
            cond_prev = jnp.logical_or(p > prev_r, no_prev)
            cond_next = jnp.logical_or(p >= next_r, no_next)
            cond = jnp.logical_and(cond_prev, cond_next)
            is_winner = cond if is_winner is None else jnp.logical_and(
                is_winner, cond)
        if is_winner is None:                   # nc == 1 degenerate case
            is_winner = jnp.ones((nc, TS), dtype=jnp.bool_)

        # 0/1 masks in bf16 (exact) for the MXU binning
        wf = is_winner.astype(jnp.bfloat16)     # group-argmax one-hot
        mtf = (kp == t).astype(jnp.bfloat16)    # position == group target
        if needs_mask:
            validf = ((lane + si * TS) < S).astype(jnp.bfloat16)
            wf = wf * validf
            mtf = mtf * validf
        wmt = wf * mtf                          # intersection mask

        # ---- per-class binning on the MXU: (nc, TS) @ (TS, nc) -> (nc, nc),
        #      then the tiny channel sum.  f32 accumulation is exact here.
        inter_c = jnp.dot(wmt, oh, preferred_element_type=jnp.float32)
        pred_c = jnp.dot(wf, oh, preferred_element_type=jnp.float32)
        gth_c = jnp.dot(mtf, oh, preferred_element_type=jnp.float32)

        partial = jnp.concatenate(
            [jnp.sum(inter_c, axis=0, keepdims=True),
             jnp.sum(pred_c, axis=0, keepdims=True),
             jnp.sum(gth_c, axis=0, keepdims=True)],
            axis=0)                             # (3, nc)

        out_ref[...] += partial[None].astype(jnp.float32)

    return kernel


# --------------------------------- wrapper ----------------------------------
def dice_score(logits, target, n_classes, ignore_chan0=True):
    nz, nc, nx, ny = logits.shape
    assert nc == n_classes
    assert nc <= 127                      # int8 target encoding
    S = nx * ny
    # TODO(synk): general S % n_classes != 0 path not implemented.
    assert S % nc == 0

    x3 = logits.reshape(nz, nc, S).astype(jnp.float32)

    # Target of the group each flattened element belongs to, at element
    # resolution (group = nc consecutive flattened probs elements), int8.
    t4 = target.reshape(nz, nc, S // nc).astype(jnp.int8)
    t_exp = jnp.repeat(t4, nc, axis=2)                  # (nz, nc, S) int8

    # Lane tile: multiple of lcm(128, nc) (layout + group alignment) unless it
    # covers the full spatial axis.
    MAX_TS = 16384
    if S <= MAX_TS:
        TS = S
    else:
        step = math.lcm(128, nc)
        TS = max(step, (MAX_TS // step) * step)
    num_tiles = pl.cdiv(S, TS)
    needs_mask = (S % TS) != 0

    # Static one-hot of lane % nc used as the MXU binning matrix.
    lane_mod = jnp.arange(TS, dtype=jnp.int32) % nc
    oh = (lane_mod[:, None] == jnp.arange(nc, dtype=jnp.int32)[None, :]
          ).astype(jnp.bfloat16)                        # (TS, nc)

    kernel = _make_dice_kernel(nc, TS, S, needs_mask)
    counts = pl.pallas_call(
        kernel,
        out_shape=jax.ShapeDtypeStruct((nz, 3, nc), jnp.float32),
        grid=(nz, num_tiles),
        in_specs=[
            pl.BlockSpec((1, nc, TS), lambda z, si: (z, 0, si)),
            pl.BlockSpec((1, nc, TS), lambda z, si: (z, 0, si)),
            pl.BlockSpec((TS, nc), lambda z, si: (0, 0)),
        ],
        out_specs=pl.BlockSpec((1, 3, nc), lambda z, si: (z, 0, 0)),
        compiler_params=pltpu.CompilerParams(
            dimension_semantics=("parallel", "arbitrary"),
            vmem_limit_bytes=48 * 1024 * 1024),
    )(x3, t_exp, oh)

    inter = jnp.sum(counts[:, 0, :], axis=0)
    pred = jnp.sum(counts[:, 1, :], axis=0)
    gth = jnp.sum(counts[:, 2, :], axis=0)
    if ignore_chan0:
        inter, pred, gth = inter[1:], pred[1:], gth[1:]

    smooth = 1e-07
    return 2.0 * inter / (pred + gth + smooth)


# ------------------------ pure-JAX reference (check) ------------------------
def dice_score_ref(logits, target, n_classes, ignore_chan0=True):
    p = jax.nn.softmax(logits.astype(jnp.float32), axis=1)
    flat = p.reshape(-1, n_classes)
    idx = jnp.argmax(flat, axis=1)
    pred_oh = jax.nn.one_hot(idx, n_classes, dtype=jnp.float32)
    tgt_oh = jax.nn.one_hot(target.reshape(-1), n_classes, dtype=jnp.float32)
    if ignore_chan0:
        pred_oh, tgt_oh = pred_oh[:, 1:], tgt_oh[:, 1:]
    inter = jnp.sum(pred_oh * tgt_oh, axis=0)
    return 2.0 * inter / (jnp.sum(pred_oh, 0) + jnp.sum(tgt_oh, 0) + 1e-07)


if __name__ == "__main__":
    key = jax.random.PRNGKey(0)
    k1, k2 = jax.random.split(key)
    nz, nc, nx, ny = 2, 4, 16, 16
    x = jax.random.normal(k1, (nz, nc, nx, ny), dtype=jnp.float32)
    target = jax.random.randint(k2, (nz, 1, nx, ny), 0, nc, dtype=jnp.int32)

    fn = jax.jit(dice_score, static_argnames=("n_classes", "ignore_chan0"))
    score = fn(x, target, n_classes=nc, ignore_chan0=True)
    score = jax.block_until_ready(score)

    ref = dice_score_ref(x, target, n_classes=nc, ignore_chan0=True)
    assert score.shape == (nc - 1,)
    assert jnp.allclose(score, ref, atol=1e-5, rtol=1e-5), (score, ref)
    print("KERNEL_OK")
</pallas_src>

<mosaic_0001>
module attributes {stable_mosaic.version = 11 : i64} {
  func.func @kernel(%arg0: i32, %arg1: i32, %arg2: memref<1x4x256xf32, #tpu.memory_space<vmem>>, %arg3: memref<1x4x256xi8, #tpu.memory_space<vmem>>, %arg4: memref<256x4xbf16, #tpu.memory_space<vmem>>, %arg5: memref<1x3x4xf32, #tpu.memory_space<vmem>>) attributes {dimension_semantics = [#tpu.dimension_semantics<parallel>, #tpu.dimension_semantics<arbitrary>], iteration_bounds = array<i64: 2, 1>, scalar_prefetch = 0 : i64, scratch_operands = 0 : i64, tpu.core_type = #tpu.core_type<tc>, window_params = [{transform_indices = @transform_0, window_bounds = array<i64: 1, 4, 256>}, {transform_indices = @transform_1, window_bounds = array<i64: 1, 4, 256>}, {pipeline_mode = #tpu.pipeline_mode<synchronous>, transform_indices = @transform_2, window_bounds = array<i64: 256, 4>}, {transform_indices = @transform_3, window_bounds = array<i64: 1, 3, 4>}]} {
    %c0_i32 = arith.constant 0 : i32
    %0 = arith.cmpi eq, %arg1, %c0_i32 : i32
    %1 = arith.extui %0 : i1 to i32
    %c0_i32_0 = arith.constant 0 : i32
    %2 = arith.cmpi ne, %1, %c0_i32_0 : i32
    scf.if %2 {
      %cst_25 = arith.constant 0.000000e+00 : f32
      %97 = vector.broadcast %cst_25 : f32 to vector<1x3x4xf32>
      %c0_26 = arith.constant 0 : index
      %c0_27 = arith.constant 0 : index
      %c0_28 = arith.constant 0 : index
      %98 = vector.load %arg5[%c0_26, %c0_27, %c0_28] : memref<1x3x4xf32, #tpu.memory_space<vmem>>, vector<1x3x4xf32>
      tpu.vector_store %arg5[%c0_26, %c0_27, %c0_28], %97 {strides = array<i32>} : memref<1x3x4xf32, #tpu.memory_space<vmem>>, vector<1x3x4xf32>,
    } else {
    }
    %c0 = arith.constant 0 : index
    %c0_1 = arith.constant 0 : index
    %c0_2 = arith.constant 0 : index
    %3 = vector.load %arg2[%c0, %c0_1, %c0_2] : memref<1x4x256xf32, #tpu.memory_space<vmem>>, vector<1x4x256xf32>
    %4 = vector.shape_cast %3 : vector<1x4x256xf32> to vector<4x256xf32>
    %c0_3 = arith.constant 0 : index
    %c0_4 = arith.constant 0 : index
    %c0_5 = arith.constant 0 : index
    %5 = vector.load %arg3[%c0_3, %c0_4, %c0_5] : memref<1x4x256xi8, #tpu.memory_space<vmem>>, vector<1x4x256xi8>
    %6 = vector.shape_cast %5 : vector<1x4x256xi8> to vector<4x256xi8>
    %7 = arith.extsi %6 : vector<4x256xi8> to vector<4x256xi32>
    %c0_6 = arith.constant 0 : index
    %c0_7 = arith.constant 0 : index
    %8 = vector.load %arg4[%c0_6, %c0_7] : memref<256x4xbf16, #tpu.memory_space<vmem>>, vector<256x4xbf16>
    %cst = arith.constant dense<0xFF800000> : vector<256xf32>
    %9 = vector.multi_reduction <maximumf>, %4, %cst [0] : vector<4x256xf32> to vector<256xf32>
    %10 = vector.shape_cast %9 : vector<256xf32> to vector<1x256xf32>
    %11 = vector.broadcast %10 : vector<1x256xf32> to vector<4x256xf32>
    %12 = arith.subf %4, %11 : vector<4x256xf32>
    %13 = math.exp %12 : vector<4x256xf32>
    %cst_8 = arith.constant dense<0.000000e+00> : vector<256xf32>
    %14 = vector.multi_reduction <add>, %13, %cst_8 [0] : vector<4x256xf32> to vector<256xf32>
    %15 = vector.shape_cast %14 : vector<256xf32> to vector<1x256xf32>
    %16 = vector.broadcast %15 : vector<1x256xf32> to vector<4x256xf32>
    %17 = arith.divf %13, %16 : vector<4x256xf32>
    %18 = tpu.iota {dimensions = array<i32: 1>} : vector<1x256xi32>
    %c3_i32 = arith.constant 3 : i32
    %19 = vector.broadcast %c3_i32 : i32 to vector<1x256xi32>
    %20 = arith.andi %18, %19 : vector<1x256xi32>
    %21 = vector.extract_strided_slice %17 {offsets = [0, 255], sizes = [4, 1], strides = [1, 1]} : vector<4x256xf32> to vector<4x1xf32>
    %22 = vector.extract_strided_slice %17 {offsets = [0, 0], sizes = [4, 255], strides = [1, 1]} : vector<4x256xf32> to vector<4x255xf32>
    %23 = tpu.concatenate %21, %22 in 1 : vector<4x1xf32>, vector<4x255xf32> -> vector<4x256xf32>
    %24 = vector.extract_strided_slice %17 {offsets = [0, 1], sizes = [4, 255], strides = [1, 1]} : vector<4x256xf32> to vector<4x255xf32>
    %25 = vector.extract_strided_slice %17 {offsets = [0, 0], sizes = [4, 1], strides = [1, 1]} : vector<4x256xf32> to vector<4x1xf32>
    %26 = tpu.concatenate %24, %25 in 1 : vector<4x255xf32>, vector<4x1xf32> -> vector<4x256xf32>
    %c1_i32 = arith.constant 1 : i32
    %27 = vector.broadcast %c1_i32 : i32 to vector<1x256xi32>
    %28 = arith.cmpi slt, %20, %27 : vector<1x256xi32>
    %c3_i32_9 = arith.constant 3 : i32
    %29 = vector.broadcast %c3_i32_9 : i32 to vector<1x256xi32>
    %30 = arith.cmpi sge, %20, %29 : vector<1x256xi32>
    %31 = arith.cmpf ogt, %17, %23 : vector<4x256xf32>
    %32 = vector.broadcast %28 : vector<1x256xi1> to vector<4x256xi1>
    %33 = arith.ori %31, %32 : vector<4x256xi1>
    %34 = arith.cmpf oge, %17, %26 : vector<4x256xf32>
    %35 = vector.broadcast %30 : vector<1x256xi1> to vector<4x256xi1>
    %36 = arith.ori %34, %35 : vector<4x256xi1>
    %37 = arith.andi %33, %36 : vector<4x256xi1>
    %38 = vector.extract_strided_slice %17 {offsets = [0, 254], sizes = [4, 2], strides = [1, 1]} : vector<4x256xf32> to vector<4x2xf32>
    %39 = vector.extract_strided_slice %17 {offsets = [0, 0], sizes = [4, 254], strides = [1, 1]} : vector<4x256xf32> to vector<4x254xf32>
    %40 = tpu.concatenate %38, %39 in 1 : vector<4x2xf32>, vector<4x254xf32> -> vector<4x256xf32>
    %41 = vector.extract_strided_slice %17 {offsets = [0, 2], sizes = [4, 254], strides = [1, 1]} : vector<4x256xf32> to vector<4x254xf32>
    %42 = vector.extract_strided_slice %17 {offsets = [0, 0], sizes = [4, 2], strides = [1, 1]} : vector<4x256xf32> to vector<4x2xf32>
    %43 = tpu.concatenate %41, %42 in 1 : vector<4x254xf32>, vector<4x2xf32> -> vector<4x256xf32>
    %c2_i32 = arith.constant 2 : i32
    %44 = vector.broadcast %c2_i32 : i32 to vector<1x256xi32>
    %45 = arith.cmpi slt, %20, %44 : vector<1x256xi32>
    %c2_i32_10 = arith.constant 2 : i32
    %46 = vector.broadcast %c2_i32_10 : i32 to vector<1x256xi32>
    %47 = arith.cmpi sge, %20, %46 : vector<1x256xi32>
    %48 = arith.cmpf ogt, %17, %40 : vector<4x256xf32>
    %49 = vector.broadcast %45 : vector<1x256xi1> to vector<4x256xi1>
    %50 = arith.ori %48, %49 : vector<4x256xi1>
    %51 = arith.cmpf oge, %17, %43 : vector<4x256xf32>
    %52 = vector.broadcast %47 : vector<1x256xi1> to vector<4x256xi1>
    %53 = arith.ori %51, %52 : vector<4x256xi1>
    %54 = arith.andi %50, %53 : vector<4x256xi1>
    %55 = arith.andi %37, %54 : vector<4x256xi1>
    %56 = vector.extract_strided_slice %17 {offsets = [0, 253], sizes = [4, 3], strides = [1, 1]} : vector<4x256xf32> to vector<4x3xf32>
    %57 = vector.extract_strided_slice %17 {offsets = [0, 0], sizes = [4, 253], strides = [1, 1]} : vector<4x256xf32> to vector<4x253xf32>
    %58 = tpu.concatenate %56, %57 in 1 : vector<4x3xf32>, vector<4x253xf32> -> vector<4x256xf32>
    %59 = vector.extract_strided_slice %17 {offsets = [0, 3], sizes = [4, 253], strides = [1, 1]} : vector<4x256xf32> to vector<4x253xf32>
    %60 = vector.extract_strided_slice %17 {offsets = [0, 0], sizes = [4, 3], strides = [1, 1]} : vector<4x256xf32> to vector<4x3xf32>
    %61 = tpu.concatenate %59, %60 in 1 : vector<4x253xf32>, vector<4x3xf32> -> vector<4x256xf32>
    %c3_i32_11 = arith.constant 3 : i32
    %62 = vector.broadcast %c3_i32_11 : i32 to vector<1x256xi32>
    %63 = arith.cmpi slt, %20, %62 : vector<1x256xi32>
    %c1_i32_12 = arith.constant 1 : i32
    %64 = vector.broadcast %c1_i32_12 : i32 to vector<1x256xi32>
    %65 = arith.cmpi sge, %20, %64 : vector<1x256xi32>
    %66 = arith.cmpf ogt, %17, %58 : vector<4x256xf32>
    %67 = vector.broadcast %63 : vector<1x256xi1> to vector<4x256xi1>
    %68 = arith.ori %66, %67 : vector<4x256xi1>
    %69 = arith.cmpf oge, %17, %61 : vector<4x256xf32>
    %70 = vector.broadcast %65 : vector<1x256xi1> to vector<4x256xi1>
    %71 = arith.ori %69, %70 : vector<4x256xi1>
    %72 = arith.andi %68, %71 : vector<4x256xi1>
    %73 = arith.andi %55, %72 : vector<4x256xi1>
    %74 = arith.extui %73 : vector<4x256xi1> to vector<4x256xi32>
    %75 = arith.sitofp %74 : vector<4x256xi32> to vector<4x256xf32>
    %76 = arith.truncf %75 : vector<4x256xf32> to vector<4x256xbf16>
    %77 = vector.broadcast %20 : vector<1x256xi32> to vector<4x256xi32>
    %78 = arith.cmpi eq, %77, %7 : vector<4x256xi32>
    %79 = arith.extui %78 : vector<4x256xi1> to vector<4x256xi32>
    %80 = arith.sitofp %79 : vector<4x256xi32> to vector<4x256xf32>
    %81 = arith.truncf %80 : vector<4x256xf32> to vector<4x256xbf16>
    %82 = arith.mulf %76, %81 : vector<4x256xbf16>
    %cst_13 = arith.constant dense<0.000000e+00> : vector<4x4xf32>
    %83 = tpu.matmul %82, %8, %cst_13 {dimension_numbers = #tpu.dot_dimension_numbers<[1], [0], [0], [1], [0, 0, 1, 1], [], []>} : vector<4x256xbf16>, vector<256x4xbf16>, vector<4x4xf32> -> vector<4x4xf32>
    %cst_14 = arith.constant dense<0.000000e+00> : vector<4x4xf32>
    %84 = tpu.matmul %76, %8, %cst_14 {dimension_numbers = #tpu.dot_dimension_numbers<[1], [0], [0], [1], [0, 0, 1, 1], [], []>} : vector<4x256xbf16>, vector<256x4xbf16>, vector<4x4xf32> -> vector<4x4xf32>
    %cst_15 = arith.constant dense<0.000000e+00> : vector<4x4xf32>
    %85 = tpu.matmul %81, %8, %cst_15 {dimension_numbers = #tpu.dot_dimension_numbers<[1], [0], [0], [1], [0, 0, 1, 1], [], []>} : vector<4x256xbf16>, vector<256x4xbf16>, vector<4x4xf32> -> vector<4x4xf32>
    %cst_16 = arith.constant dense<0.000000e+00> : vector<4xf32>
    %86 = vector.multi_reduction <add>, %83, %cst_16 [0] : vector<4x4xf32> to vector<4xf32>
    %87 = vector.shape_cast %86 : vector<4xf32> to vector<1x4xf32>
    %cst_17 = arith.constant dense<0.000000e+00> : vector<4xf32>
    %88 = vector.multi_reduction <add>, %84, %cst_17 [0] : vector<4x4xf32> to vector<4xf32>
    %89 = vector.shape_cast %88 : vector<4xf32> to vector<1x4xf32>
    %cst_18 = arith.constant dense<0.000000e+00> : vector<4xf32>
    %90 = vector.multi_reduction <add>, %85, %cst_18 [0] : vector<4x4xf32> to vector<4xf32>
    %91 = vector.shape_cast %90 : vector<4xf32> to vector<1x4xf32>
    %92 = tpu.concatenate %87, %89, %91 in 0 : vector<1x4xf32>, vector<1x4xf32>, vector<1x4xf32> -> vector<3x4xf32>
    %c0_19 = arith.constant 0 : index
    %c0_20 = arith.constant 0 : index
    %c0_21 = arith.constant 0 : index
    %93 = vector.load %arg5[%c0_19, %c0_20, %c0_21] : memref<1x3x4xf32, #tpu.memory_space<vmem>>, vector<1x3x4xf32>
    %94 = vector.shape_cast %92 : vector<3x4xf32> to vector<1x3x4xf32>
    %95 = arith.addf %93, %94 : vector<1x3x4xf32>
    %c0_22 = arith.constant 0 : index
    %c0_23 = arith.constant 0 : index
    %c0_24 = arith.constant 0 : index
    %96 = vector.load %arg5[%c0_22, %c0_23, %c0_24] : memref<1x3x4xf32, #tpu.memory_space<vmem>>, vector<1x3x4xf32>
    tpu.vector_store %arg5[%c0_22, %c0_23, %c0_24], %95 {strides = array<i32>} : memref<1x3x4xf32, #tpu.memory_space<vmem>>, vector<1x3x4xf32>,
    return
  }
  func.func @transform_0(%arg0: i32, %arg1: i32) -> (i32, i32, i32) {
    %c0_i32 = arith.constant 0 : i32
    %c0_i32_0 = arith.constant 0 : i32
    return %arg0, %c0_i32, %arg1 : i32, i32, i32
  }
  func.func @transform_1(%arg0: i32, %arg1: i32) -> (i32, i32, i32) {
    %c0_i32 = arith.constant 0 : i32
    %c0_i32_0 = arith.constant 0 : i32
    return %arg0, %c0_i32, %arg1 : i32, i32, i32
  }
  func.func @transform_2(%arg0: i32, %arg1: i32) -> (i32, i32) {
    %c0_i32 = arith.constant 0 : i32
    %c0_i32_0 = arith.constant 0 : i32
    %c0_i32_1 = arith.constant 0 : i32
    return %c0_i32, %c0_i32_0 : i32, i32
  }
  func.func @transform_3(%arg0: i32, %arg1: i32) -> (i32, i32, i32) {
    %c0_i32 = arith.constant 0 : i32
    %c0_i32_0 = arith.constant 0 : i32
    %c0_i32_1 = arith.constant 0 : i32
    return %arg0, %c0_i32, %c0_i32_0 : i32, i32, i32
  }
}

</mosaic_0001>

<llo_original>
// kernel: dice_score.1
$region0: #{dice_score.1}
  #allocation0 [shape = 'u32[]', space=smem, size = 0x4, offset = 0x4, fixed_abs, tag = 'smem constant byte address 0x4 - core index']
  #allocation1 [shape = 'u32[144,128]{1,0:T(1,128)}', space=vmem, size = 0x12000, scoped, tag = 'internal scratch']
  %s0 = inlined_call_operand.vmem [shape: f32[2,4,256], index: 0, kind: input, shape index: {}]
  %s1 = inlined_call_operand.vmem [shape: s8[2,4,256], index: 1, kind: input, shape index: {}]
  %s2 = inlined_call_operand.vmem [shape: bf16[256,4], index: 2, kind: input, shape index: {}]
  %s3 = inlined_call_operand.vmem [shape: f32[2,3,4], index: 3, kind: output, shape index: {}]
  %s4 = sld [smem:[#allocation0]]
  $region49: #{dice_score.1} parent=0
    _
  %s6 = ssub.s32 1, %s4
  %s7 = scalar_select 0, %s6, %s4
  loop: start=0, step=1, limit=4
  $region2: #{dice_score.1} parent=0 // loop_pre_header
    _
  $region3: #{dice_score.1} parent=0 // loop_header
    %s9 = sphi 0, %s13
    %p10 = scmp.ge.s32.totalorder %s9, 4
    %s16 = sphi 0, %s28
    %s17 = sphi 0, %s24
    %s18 = sphi 0, %s16
    %s19 = sphi 0, %s17
    %s20 = sphi 0, %s18
    %s21 = sphi 0, %s19
    %s33 = sphi 0, %s35
    %s36 = sphi 0, %s33
    %s37 = sphi 0, %s36
    %s53 = sphi 0, %s37
    %s61 = sphi 0, %s63
    %s64 = sphi 0, %s61
    %s65 = sphi 0, %s64
    %s81 = sphi 0, %s65
    %s85 = sphi 0, %s85
    %s87 = sphi 0, %s85
    %s88 = sphi 0, %s87
    %s102 = sphi 0, %s88
    %s108 = sphi 0, %s110
    %s111 = sphi 0, %s108
    %s112 = sphi 0, %s111
    %s128 = sphi 0, %s112
  $region4: #{dice_score.1} parent=0 // loop_header_branch
    %12 = sbr.rel (%p10) target = $region8
  $region5: #{dice_score.1} parent=0 // loop_body
    %s14 = ssub.s32 %s9, 1
    %s15 = ssub.s32 %s9, 2
    %s22 = sadd.s32 1, %s17
    %p23 = scmp.ge.s32.totalorder %s22, 1
    %s24 = scalar_select %p23, 0, %s22
    %s25 = sadd.s32 1, %s16
    %s26 = scalar_select %p23, %s25, %s16
    %p27 = scmp.ge.s32.totalorder %s26, 2
    %s28 = scalar_select %p27, 0, %s26
    %s29 = ssub.s32 %s16, %s28
    %s30 = ssub.s32 %s17, %s24
    %s31 = sor.u32 %s29, %s30
    %p32 = scmp.eq.s32.totalorder %s31, 0
    %s34 = sadd.s32 %s33, 1
    %s35 = scalar_select %p32, %s33, %s34
    %p38 = pneg %p32
    %p39 = scmp.eq.s32.totalorder %s9, 1
    %p40 = por %p38, %p39
    %p41 = scmp.ne.s32.totalorder %s33, %s36
    %p42 = scmp.eq.s32.totalorder %s9, 0
    %p43 = por %p41, %p42
    %p44 = scmp.ne.s32.totalorder %s33, %s36
    %p45 = scmp.eq.s32.totalorder %s14, 1
    %p46 = por %p44, %p45
    %p47 = scmp.ne.s32.totalorder %s36, %s37
    %p48 = scmp.eq.s32.totalorder %s14, 0
    %p49 = por %p47, %p48
    %p50 = scmp.ne.s32.totalorder %s36, %s37
    %p51 = scmp.eq.s32.totalorder %s15, 1
    %p52 = por %p50, %p51
    %p54 = scmp.ne.s32.totalorder %s37, %s53
    %p55 = scmp.eq.s32.totalorder %s15, 0
    %p56 = por %p54, %p55
    %s57 = ssub.s32 %s16, %s28
    %s58 = ssub.s32 %s17, %s24
    %s59 = sor.u32 %s57, %s58
    %p60 = scmp.eq.s32.totalorder %s59, 0
    %s62 = sadd.s32 %s61, 1
    %s63 = scalar_select %p60, %s61, %s62
    %p66 = pneg %p60
    %p67 = scmp.eq.s32.totalorder %s9, 1
    %p68 = por %p66, %p67
    %p69 = scmp.ne.s32.totalorder %s61, %s64
    %p70 = scmp.eq.s32.totalorder %s9, 0
    %p71 = por %p69, %p70
    %p72 = scmp.ne.s32.totalorder %s61, %s64
    %p73 = scmp.eq.s32.totalorder %s14, 1
    %p74 = por %p72, %p73
    %p75 = scmp.ne.s32.totalorder %s64, %s65
    %p76 = scmp.eq.s32.totalorder %s14, 0
    %p77 = por %p75, %p76
    %p78 = scmp.ne.s32.totalorder %s64, %s65
    %p79 = scmp.eq.s32.totalorder %s15, 1
    %p80 = por %p78, %p79
    %p82 = scmp.ne.s32.totalorder %s65, %s81
    %p83 = scmp.eq.s32.totalorder %s15, 0
    %p84 = por %p82, %p83
    %s86 = sadd.s32 %s85, 1
    %p89 = scmp.eq.s32.totalorder %s9, 1
    %p90 = scmp.ne.s32.totalorder %s85, %s87
    %p91 = scmp.eq.s32.totalorder %s9, 0
    %p92 = por %p90, %p91
    %p93 = scmp.ne.s32.totalorder %s85, %s87
    %p94 = scmp.eq.s32.totalorder %s14, 1
    %p95 = por %p93, %p94
    %p96 = scmp.ne.s32.totalorder %s87, %s88
    %p97 = scmp.eq.s32.totalorder %s14, 0
    %p98 = por %p96, %p97
    %p99 = scmp.ne.s32.totalorder %s87, %s88
    %p100 = scmp.eq.s32.totalorder %s15, 1
    %p101 = por %p99, %p100
    %p103 = scmp.ne.s32.totalorder %s88, %s102
    %p104 = scmp.eq.s32.totalorder %s15, 0
    %p105 = por %p103, %p104
    %s106 = ssub.s32 %s16, %s28
    %p107 = scmp.eq.s32.totalorder %s106, 0
    %s109 = sadd.s32 %s108, 1
    %s110 = scalar_select %p107, %s108, %s109
    %p113 = pneg %p107
    %p114 = scmp.eq.s32.totalorder %s9, 1
    %p115 = por %p113, %p114
    %p116 = scmp.ne.s32.totalorder %s108, %s111
    %p117 = scmp.eq.s32.totalorder %s9, 0
    %p118 = por %p116, %p117
    %p119 = scmp.ne.s32.totalorder %s108, %s111
    %p120 = scmp.eq.s32.totalorder %s14, 1
    %p121 = por %p119, %p120
    %p122 = scmp.ne.s32.totalorder %s111, %s112
    %p123 = scmp.eq.s32.totalorder %s14, 0
    %p124 = por %p122, %p123
    %p125 = scmp.ne.s32.totalorder %s111, %s112
    %p126 = scmp.eq.s32.totalorder %s15, 1
    %p127 = por %p125, %p126
    %p129 = scmp.ne.s32.totalorder %s112, %s128
    %p130 = scmp.eq.s32.totalorder %s15, 0
    %p131 = por %p129, %p130
    %p132 = scmp.le.s32.totalorder 1, %s9
    %p133 = scmp.lt.s32.totalorder %s9, 3
    %p134 = pnand %p132, %p133
    %p135 = pneg %p134
    // Predicated region
    $region9: #{dice_score.1} parent=5 // pred_check
      _
    $region10: #{dice_score.1} parent=5 // pred_check_branch
      %137 = sbr.rel (%p134) target = $region12
    $region11: #{dice_score.1} parent=5 // pred_region
      %s138 = ssub.s32 %s9, 1
      // Predicated region
      $region13: #{dice_score.1} parent=11 // pred_check
        %p139 = pneg %p98
      $region14: #{dice_score.1} parent=11 // pred_check_branch
        %141 = sbr.rel (%p139) target = $region16
      $region15: #{dice_score.1} parent=11 // pred_region
        _
      $region16: #{dice_score.1} parent=11 // pred_fallthru
        _
    $region12: #{dice_score.1} parent=5 // pred_fallthru
      _
    %p142 = scmp.lt.s32.totalorder %s9, 2
    // Predicated region
    $region17: #{dice_score.1} parent=5 // pred_check
      %p143 = pneg %p142
    $region18: #{dice_score.1} parent=5 // pred_check_branch
      %145 = sbr.rel (%p143) target = $region20
    $region19: #{dice_score.1} parent=5 // pred_region
      // Predicated region
      $region21: #{dice_score.1} parent=19 // pred_check
        %p146 = pneg %p43
      $region22: #{dice_score.1} parent=19 // pred_check_branch
        %148 = sbr.rel (%p146) target = $region24
      $region23: #{dice_score.1} parent=19 // pred_region
        %s149 = smul.u32 2, %s17
        %p150 = scmp.lt.s32.totalorder %s16, 1
        %s151 = scalar_select %p150, %s16, 1
        %p152 = scmp.lt.s32.totalorder %s149, 1
        %s153 = scalar_select %p152, %s149, 1
        %s154 = smul.addr %s151, 2
        %s155 = sadd.s32 %s153, %s154
        %s156 = smul.addr %s155, 4
        %s157 = scalar_lea.vmem %s0, %s156
        %s158 = smul.u32 2, %s17
      $region24: #{dice_score.1} parent=19 // pred_fallthru
        _
      // Predicated region
      $region25: #{dice_score.1} parent=19 // pred_check
        %p159 = pneg %p71
      $region26: #{dice_score.1} parent=19 // pred_check_branch
        %161 = sbr.rel (%p159) target = $region28
      $region27: #{dice_score.1} parent=19 // pred_region
        %s162 = smul.u32 2, %s17
        %p163 = scmp.lt.s32.totalorder %s16, 1
        %s164 = scalar_select %p163, %s16, 1
        %p165 = scmp.lt.s32.totalorder %s162, 1
        %s166 = scalar_select %p165, %s162, 1
        %s167 = smul.addr %s164, 2
        %s168 = sadd.s32 %s166, %s167
        %s169 = scalar_lea.vmem %s1, %s168
        %s170 = smul.u32 2, %s17
      $region28: #{dice_score.1} parent=19 // pred_fallthru
        _
    $region20: #{dice_score.1} parent=5 // pred_fallthru
      _
    %p171 = scmp.le.s32.totalorder 1, %s9
    %p172 = scmp.lt.s32.totalorder %s9, 3
    %p173 = pnand %p171, %p172
    %p174 = pneg %p173
    // Predicated region
    $region29: #{dice_score.1} parent=5 // pred_check
      _
    $region30: #{dice_score.1} parent=5 // pred_check_branch
      %176 = sbr.rel (%p173) target = $region32
    $region31: #{dice_score.1} parent=5 // pred_region
      %s177 = ssub.s32 %s9, 1
      %s178 = smul.u32 2, %s19
      %p179 = scmp.lt.s32.totalorder %s18, 1
      %s180 = scalar_select %p179, %s18, 1
      %p181 = scmp.lt.s32.totalorder %s178, 1
      %s182 = scalar_select %p181, %s178, 1
      %s183 = smul.addr %s180, 2
      %s184 = sadd.s32 %s182, %s183
      %s185 = smul.addr %s184, 4
      %s186 = scalar_lea.vmem %s0, %s185
      %p187 = pneg %p49
      %p188 = pneg %p46
      %s189 = smul.u32 2, %s19
      %p190 = scmp.lt.s32.totalorder %s18, 1
      %s191 = scalar_select %p190, %s18, 1
      %p192 = scmp.lt.s32.totalorder %s189, 1
      %s193 = scalar_select %p192, %s189, 1
      %s194 = smul.addr %s191, 2
      %s195 = sadd.s32 %s193, %s194
      %s196 = scalar_lea.vmem %s1, %s195
      %p197 = pneg %p77
      %p198 = pneg %p74
      %p199 = pneg %p98
      %p200 = pneg %p95
      %p201 = pneg %p124
      %p202 = pneg %p121
      %p203 = scmp.lt.s32.totalorder %s18, 1
      %s204 = scalar_select %p203, %s18, 1
      %s205 = smul.addr %s204, 4
      %s206 = scalar_lea.vmem %s3, %s205
      %s207 = smul.u32 2, %s19
      %p208 = scmp.lt.s32.totalorder %s18, 1
      %s209 = scalar_select %p208, %s18, 1
      %p210 = scmp.lt.s32.totalorder %s207, 1
      %s211 = scalar_select %p210, %s207, 1
      %s212 = smul.addr %s209, 2
      %s213 = sadd.s32 %s211, %s212
      %s214 = smul.addr %s213, 4
      %s215 = scalar_lea.vmem %s0, %s214
      %s216 = smul.u32 2, %s19
      %s217 = smul.u32 2, %s19
      %p218 = scmp.lt.s32.totalorder %s18, 1
      %s219 = scalar_select %p218, %s18, 1
      %p220 = scmp.lt.s32.totalorder %s217, 1
      %s221 = scalar_select %p220, %s217, 1
      %s222 = smul.addr %s219, 2
      %s223 = sadd.s32 %s221, %s222
      %s224 = scalar_lea.vmem %s1, %s223
      %s225 = smul.u32 2, %s19
      %p226 = scmp.lt.s32.totalorder %s18, 1
      %s227 = scalar_select %p226, %s18, 1
      %s228 = smul.addr %s227, 4
      %s229 = scalar_lea.vmem %s3, %s228
      %p231 = scmp.eq.s32.totalorder %s19, 0
      // Predicated region
      $region33: #{dice_score.1} parent=31 // pred_check
        %p232 = pneg %p231
      $region34: #{dice_score.1} parent=31 // pred_check_branch
        %234 = sbr.rel (%p232) target = $region36
      $region35: #{dice_score.1} parent=31 // pred_region
        %vm235 = vcmask 26624
        %236 = vst.msk [vmem:[%s229] sm:$0x7] %vm235, 0.0
      $region36: #{dice_score.1} parent=31 // pred_fallthru
        _
      %v237 = vld [vmem:[%s215] sm:$0xff]
      %v238 = vld [vmem:[%s224] sm:$0x3]
      %v239 = vunpack.c.0.s8 %v238
      %v240 = vld [vmem:[%s2] sm:$0xf]
      %v241 = vld [vmem:[%s2 + $0x4] sm:$0xf]
      %v242 = vld [vmem:[%s2 + $0x8] sm:$0xf]
      %v243 = vld [vmem:[%s2 + $0xc] sm:$0xf]
      %v244 = vld [vmem:[%s2 + $0x10] sm:$0xf]
      %v245 = vld [vmem:[%s2 + $0x14] sm:$0xf]
      %v246 = vld [vmem:[%s2 + $0x18] sm:$0xf]
      %v247 = vld [vmem:[%s2 + $0x1c] sm:$0xf]
      %v248 = vld [vmem:[%s2 + $0x20] sm:$0xf]
      %v249 = vld [vmem:[%s2 + $0x24] sm:$0xf]
      %v250 = vld [vmem:[%s2 + $0x28] sm:$0xf]
      %v251 = vld [vmem:[%s2 + $0x2c] sm:$0xf]
      %v252 = vld [vmem:[%s2 + $0x30] sm:$0xf]
      %v253 = vld [vmem:[%s2 + $0x34] sm:$0xf]
      %v254 = vld [vmem:[%s2 + $0x38] sm:$0xf]
      %v255 = vld [vmem:[%s2 + $0x3c] sm:$0xf]
      %v256 = vld [vmem:[%s2 + $0x40] sm:$0xf]
      %v257 = vld [vmem:[%s2 + $0x44] sm:$0xf]
      %v258 = vld [vmem:[%s2 + $0x48] sm:$0xf]
      %v259 = vld [vmem:[%s2 + $0x4c] sm:$0xf]
      %v260 = vld [vmem:[%s2 + $0x50] sm:$0xf]
      %v261 = vld [vmem:[%s2 + $0x54] sm:$0xf]
      %v262 = vld [vmem:[%s2 + $0x58] sm:$0xf]
      %v263 = vld [vmem:[%s2 + $0x5c] sm:$0xf]
      %v264 = vld [vmem:[%s2 + $0x60] sm:$0xf]
      %v265 = vld [vmem:[%s2 + $0x64] sm:$0xf]
      %v266 = vld [vmem:[%s2 + $0x68] sm:$0xf]
      %v267 = vld [vmem:[%s2 + $0x6c] sm:$0xf]
      %v268 = vld [vmem:[%s2 + $0x70] sm:$0xf]
      %v269 = vld [vmem:[%s2 + $0x74] sm:$0xf]
      %v270 = vld [vmem:[%s2 + $0x78] sm:$0xf]
      %v271 = vld [vmem:[%s2 + $0x7c] sm:$0xf]
      %v273 = vcombine.high %v237, %v237
      %vm275 = vcmask 1043456
      %v276 = vsel %vm275, %v237, -inf
      %v277 = vrot.slane %v276, 4
      %v278 = vmax.f32 %v276, %v277
      %v279 = vrot.slane %v278, 2
      %v280 = vmax.f32 %v278, %v279
      %v281 = vrot.slane %v280, 1
      %v282 = vmax.f32 %v280, %v281
      %v283 = vsel %vm275, %v273, -inf
      %v284 = vrot.slane %v283, 4
      %v285 = vmax.f32 %v283, %v284
      %v286 = vrot.slane %v285, 2
      %v287 = vmax.f32 %v285, %v286
      %v288 = vrot.slane %v287, 1
      %v289 = vmax.f32 %v287, %v288
      %v292 = vcombine.low %v282, %v289
      %v294 = vsub.f32 %v237, %v292
      %v295 = vmul.f32 %v294, 1.442695
      %v296 = vpow.pop %v295
      %v298 = vcombine.high %v296, %v296
      %v300 = vsel %vm275, %v296, 0.0
      %v301 = vrot.slane %v300, 4
      %v302 = vadd.f32 %v300, %v301
      %v303 = vrot.slane %v302, 2
      %v304 = vadd.f32 %v302, %v303
      %v305 = vrot.slane %v304, 1
      %v306 = vadd.f32 %v304, %v305
      %v307 = vsel %vm275, %v298, 0.0
      %v308 = vrot.slane %v307, 4
      %v309 = vadd.f32 %v307, %v308
      %v310 = vrot.slane %v309, 2
      %v311 = vadd.f32 %v309, %v310
      %v312 = vrot.slane %v311, 1
      %v313 = vadd.f32 %v311, %v312
      %v316 = vcombine.low %v306, %v313
      %v318 = vrcp.pop %v316
      %v319 = vmul.f32 %v296, %v318
      %v320 = vlaneseq
      %v321 = vand.u32 %v320, 127
      %v322 = vadd.s32 %v321, 128
      %v323 = vand.u32 %v321, 3
      %v324 = vand.u32 %v322, 3
      %v326 = vcombine.high %v319, %v319
      %327 = vrot.lane.b32.xlu0 %v326, 1
      %v328 = vpop.permute.xlu0 %327
      %330 = vrot.lane.b32.xlu0 %v319, 1
      %v331 = vpop.permute.xlu0 %330
      %vm332 = vcmask 7168
      %v333 = vsel %vm332, %v331, %v328
      %v335 = vsel %vm332, %v328, %v331
      %336 = vrot.lane.b32.xlu0 %v319, 127
      %v337 = vpop.permute.xlu0 %336
      %338 = vrot.lane.b32.xlu0 %v326, 127
      %v339 = vpop.permute.xlu0 %338
      %vm340 = vcmask 1039360
      %v341 = vsel %vm340, %v337, %v339
      %v344 = vsel %vm340, %v339, %v337
      %vm345 = vcmp.lt.s32.totalorder %v323, 1
      %vm346 = vcmp.lt.s32.totalorder %v324, 1
      %vm347 = vcmp.ge.s32.totalorder %v323, 3
      %vm348 = vcmp.ge.s32.totalorder %v324, 3
      %v350 = vcombine.low %v335, %v333
      %vm352 = vcmp.gt.f32.partialorder %v319, %v350
      %v353 = vsel %vm345, 1, 0
      %v354 = vsel %vm346, 1, 0
      %vm355 = vcmp.eq.s32.totalorder %v353, 1
      %vm356 = vcmp.eq.s32.totalorder %v354, 1
      %v357 = vsel %vm355, 1, 0
      %v358 = vsel %vm356, 1, 0
      %v359 = vcombine.low %v357, %v358
      %vm360 = vcmp.ne.s32.totalorder %v359, 0
      %vm361 = vmor %vm352, %vm360
      %v363 = vcombine.low %v341, %v344
      %vm365 = vcmp.ge.f32.partialorder %v319, %v363
      %v366 = vsel %vm347, 1, 0
      %v367 = vsel %vm348, 1, 0
      %vm368 = vcmp.eq.s32.totalorder %v366, 1
      %vm369 = vcmp.eq.s32.totalorder %v367, 1
      %v370 = vsel %vm368, 1, 0
      %v371 = vsel %vm369, 1, 0
      %v372 = vcombine.low %v370, %v371
      %vm373 = vcmp.ne.s32.totalorder %v372, 0
      %vm374 = vmor %vm365, %vm373
      %vm375 = vmand %vm361, %vm374
      %376 = vrot.lane.b32.xlu0 %v326, 2
      %v377 = vpop.permute.xlu0 %376
      %379 = vrot.lane.b32.xlu0 %v319, 2
      %v380 = vpop.permute.xlu0 %379
      %vm381 = vcmask 15360
      %v382 = vsel %vm381, %v380, %v377
      %v384 = vsel %vm381, %v377, %v380
      %385 = vrot.lane.b32.xlu0 %v319, 126
      %v386 = vpop.permute.xlu0 %385
      %387 = vrot.lane.b32.xlu0 %v326, 126
      %v388 = vpop.permute.xlu0 %387
      %vm389 = vcmask 1031168
      %v390 = vsel %vm389, %v386, %v388
      %v393 = vsel %vm389, %v388, %v386
      %vm394 = vcmp.lt.s32.totalorder %v323, 2
      %vm395 = vcmp.lt.s32.totalorder %v324, 2
      %vm396 = vcmp.ge.s32.totalorder %v323, 2
      %vm397 = vcmp.ge.s32.totalorder %v324, 2
      %v399 = vcombine.low %v384, %v382
      %vm401 = vcmp.gt.f32.partialorder %v319, %v399
      %v402 = vsel %vm394, 1, 0
      %v403 = vsel %vm395, 1, 0
      %vm404 = vcmp.eq.s32.totalorder %v402, 1
      %vm405 = vcmp.eq.s32.totalorder %v403, 1
      %v406 = vsel %vm404, 1, 0
      %v407 = vsel %vm405, 1, 0
      %v408 = vcombine.low %v406, %v407
      %vm409 = vcmp.ne.s32.totalorder %v408, 0
      %vm410 = vmor %vm401, %vm409
      %v412 = vcombine.low %v390, %v393
      %vm414 = vcmp.ge.f32.partialorder %v319, %v412
      %v415 = vsel %vm396, 1, 0
      %v416 = vsel %vm397, 1, 0
      %vm417 = vcmp.eq.s32.totalorder %v415, 1
      %vm418 = vcmp.eq.s32.totalorder %v416, 1
      %v419 = vsel %vm417, 1, 0
      %v420 = vsel %vm418, 1, 0
      %v421 = vcombine.low %v419, %v420
      %vm422 = vcmp.ne.s32.totalorder %v421, 0
      %vm423 = vmor %vm414, %vm422
      %vm424 = vmand %vm410, %vm423
      %vm425 = vmand %vm375, %vm424
      %426 = vrot.lane.b32.xlu0 %v326, 3
      %v427 = vpop.permute.xlu0 %426
      %429 = vrot.lane.b32.xlu0 %v319, 3
      %v430 = vpop.permute.xlu0 %429
      %vm431 = vcmask 23552
      %v432 = vsel %vm431, %v430, %v427
      %v434 = vsel %vm431, %v427, %v430
      %435 = vrot.lane.b32.xlu0 %v319, 125
      %v436 = vpop.permute.xlu0 %435
      %437 = vrot.lane.b32.xlu0 %v326, 125
      %v438 = vpop.permute.xlu0 %437
      %vm439 = vcmask 1022976
      %v440 = vsel %vm439, %v436, %v438
      %v443 = vsel %vm439, %v438, %v436
      %vm444 = vcmp.lt.s32.totalorder %v323, 3
      %vm445 = vcmp.lt.s32.totalorder %v324, 3
      %vm446 = vcmp.ge.s32.totalorder %v323, 1
      %vm447 = vcmp.ge.s32.totalorder %v324, 1
      %v449 = vcombine.low %v434, %v432
      %vm451 = vcmp.gt.f32.partialorder %v319, %v449
      %v452 = vsel %vm444, 1, 0
      %v453 = vsel %vm445, 1, 0
      %vm454 = vcmp.eq.s32.totalorder %v452, 1
      %vm455 = vcmp.eq.s32.totalorder %v453, 1
      %v456 = vsel %vm454, 1, 0
      %v457 = vsel %vm455, 1, 0
      %v458 = vcombine.low %v456, %v457
      %vm459 = vcmp.ne.s32.totalorder %v458, 0
      %vm460 = vmor %vm451, %vm459
      %v462 = vcombine.low %v440, %v443
      %vm464 = vcmp.ge.f32.partialorder %v319, %v462
      %v465 = vsel %vm446, 1, 0
      %v466 = vsel %vm447, 1, 0
      %vm467 = vcmp.eq.s32.totalorder %v465, 1
      %vm468 = vcmp.eq.s32.totalorder %v466, 1
      %v469 = vsel %vm467, 1, 0
      %v470 = vsel %vm468, 1, 0
      %v471 = vcombine.low %v469, %v470
      %vm472 = vcmp.ne.s32.totalorder %v471, 0
      %vm473 = vmor %vm464, %vm472
      %vm474 = vmand %vm460, %vm473
      %vm475 = vmand %vm425, %vm474
      %v476 = vsel %vm475, 1, 0
      %v477 = vcvt.s32.f32 %v476
      %v479 = vcombine.high %v477, %v477
      %v481 = vpack.c.bf16 %v477, %v477
      %v482 = vpack.c.bf16 %v479, %v479
      %v483 = vcombine.high %v239, %v239
      %vm484 = vcmp.eq.s32.totalorder %v323, %v239
      %vm485 = vcmp.eq.s32.totalorder %v324, %v483
      %v486 = vsel %vm484, 1, 0
      %v487 = vsel %vm485, 1, 0
      %v488 = vcvt.s32.f32 %v486
      %v489 = vcvt.s32.f32 %v487
      %v490 = vpack.c.bf16 %v488, %v488
      %v491 = vpack.c.bf16 %v489, %v489
      %v492 = vmul.bf16 %v481, %v490
      %v493 = vmul.bf16 %v482, %v491
      %v526 = vunpack.c.l.b16 %v240
      %v527 = vunpack.c.l.b16 %v241
      %v528 = vunpack.c.l.b16 %v242
      %v529 = vunpack.c.l.b16 %v243
      %v530 = vunpack.c.l.b16 %v244
      %v531 = vunpack.c.l.b16 %v245
      %v532 = vunpack.c.l.b16 %v246
      %v533 = vunpack.c.l.b16 %v247
      %v534 = vunpack.c.l.b16 %v248
      %v535 = vunpack.c.l.b16 %v249
      %v536 = vunpack.c.l.b16 %v250
      %v537 = vunpack.c.l.b16 %v251
      %v538 = vunpack.c.l.b16 %v252
      %v539 = vunpack.c.l.b16 %v253
      %v540 = vunpack.c.l.b16 %v254
      %v541 = vunpack.c.l.b16 %v255
      %v542 = vunpack.c.l.b16 %v256
      %v543 = vunpack.c.l.b16 %v257
      %v544 = vunpack.c.l.b16 %v258
      %v545 = vunpack.c.l.b16 %v259
      %v546 = vunpack.c.l.b16 %v260
      %v547 = vunpack.c.l.b16 %v261
      %v548 = vunpack.c.l.b16 %v262
      %v549 = vunpack.c.l.b16 %v263
      %v550 = vunpack.c.l.b16 %v264
      %v551 = vunpack.c.l.b16 %v265
      %v552 = vunpack.c.l.b16 %v266
      %v553 = vunpack.c.l.b16 %v267
      %v554 = vunpack.c.l.b16 %v268
      %v555 = vunpack.c.l.b16 %v269
      %v556 = vunpack.c.l.b16 %v270
      %v557 = vunpack.c.l.b16 %v271
      %v558 = vpack.c.b16 %v527, %v526
      %v559 = vpack.c.b16 %v529, %v528
      %v560 = vpack.c.b16 %v531, %v530
      %v561 = vpack.c.b16 %v533, %v532
      %v562 = vpack.c.b16 %v535, %v534
      %v563 = vpack.c.b16 %v537, %v536
      %v564 = vpack.c.b16 %v539, %v538
      %v565 = vpack.c.b16 %v541, %v540
      %v566 = vpack.c.b16 %v543, %v542
      %v567 = vpack.c.b16 %v545, %v544
      %v568 = vpack.c.b16 %v547, %v546
      %v569 = vpack.c.b16 %v549, %v548
      %v570 = vpack.c.b16 %v551, %v550
      %v571 = vpack.c.b16 %v553, %v552
      %v572 = vpack.c.b16 %v555, %v554
      %v573 = vpack.c.b16 %v557, %v556
      %590 = vmatprep.subr.bf16.mxu0 0
      %591 = vmatpush1.bf16.msra.mxu0 %v558
      %592 = vmatprep.subr.bf16.mxu0 0
      %593 = vmatpush1.bf16.msra.mxu0 %v559
      %594 = vmatprep.subr.bf16.mxu0 0
      %595 = vmatpush1.bf16.msra.mxu0 %v560
      %596 = vmatprep.subr.bf16.mxu0 0
      %597 = vmatpush1.bf16.msra.mxu0 %v561
      %598 = vmatprep.subr.bf16.mxu0 0
      %599 = vmatpush1.bf16.msra.mxu0 %v562
      %600 = vmatprep.subr.bf16.mxu0 0
      %601 = vmatpush1.bf16.msra.mxu0 %v563
      %602 = vmatprep.subr.bf16.mxu0 0
      %603 = vmatpush1.bf16.msra.mxu0 %v564
      %604 = vmatprep.subr.bf16.mxu0 0
      %605 = vmatpush1.bf16.msra.mxu0 %v565
      %606 = vmatprep.subr.bf16.mxu0 0
      %607 = vmatpush1.bf16.msra.mxu0 %v566
      %608 = vmatprep.subr.bf16.mxu0 0
      %609 = vmatpush1.bf16.msra.mxu0 %v567
      %610 = vmatprep.subr.bf16.mxu0 0
      %611 = vmatpush1.bf16.msra.mxu0 %v568
      %612 = vmatprep.subr.bf16.mxu0 0
      %613 = vmatpush1.bf16.msra.mxu0 %v569
      %614 = vmatprep.subr.bf16.mxu0 0
      %615 = vmatpush1.bf16.msra.mxu0 %v570
      %616 = vmatprep.subr.bf16.mxu0 0
      %617 = vmatpush1.bf16.msra.mxu0 %v571
      %618 = vmatprep.subr.bf16.mxu0 0
      %619 = vmatpush1.bf16.msra.mxu0 %v572
      %620 = vmatprep.subr.bf16.mxu0 0
      %621 = vmatpush1.bf16.msra.mxu0 %v573
      %622 = vmatprep.mubr.bf16.mxu0 %v493
      %623 = vmatmul.mubr.bf16.gmra.mrb[0].mxu0 %v492
      %v624 = vpop.f32.mrb[0].mxu0
      %v625 = vadd.f32 0.0, %v624
      %v626 = vpop.f32.mrb[0].mxu0
      %v627 = vpop.f32.mrb[0].mxu0
      %v628 = vpop.f32.mrb[0].mxu0
      %629 = vdwg.mxu0
      %630 = vmatprep.subr.bf16.mxu0 0
      %631 = vmatpush1.bf16.msra.mxu0 %v558
      %632 = vmatprep.subr.bf16.mxu0 0
      %633 = vmatpush1.bf16.msra.mxu0 %v559
      %634 = vmatprep.subr.bf16.mxu0 0
      %635 = vmatpush1.bf16.msra.mxu0 %v560
      %636 = vmatprep.subr.bf16.mxu0 0
      %637 = vmatpush1.bf16.msra.mxu0 %v561
      %638 = vmatprep.subr.bf16.mxu0 0
      %639 = vmatpush1.bf16.msra.mxu0 %v562
      %640 = vmatprep.subr.bf16.mxu0 0
      %641 = vmatpush1.bf16.msra.mxu0 %v563
      %642 = vmatprep.subr.bf16.mxu0 0
      %643 = vmatpush1.bf16.msra.mxu0 %v564
      %644 = vmatprep.subr.bf16.mxu0 0
      %645 = vmatpush1.bf16.msra.mxu0 %v565
      %646 = vmatprep.subr.bf16.mxu0 0
      %647 = vmatpush1.bf16.msra.mxu0 %v566
      %648 = vmatprep.subr.bf16.mxu0 0
      %649 = vmatpush1.bf16.msra.mxu0 %v567
      %650 = vmatprep.subr.bf16.mxu0 0
      %651 = vmatpush1.bf16.msra.mxu0 %v568
      %652 = vmatprep.subr.bf16.mxu0 0
      %653 = vmatpush1.bf16.msra.mxu0 %v569
      %654 = vmatprep.subr.bf16.mxu0 0
      %655 = vmatpush1.bf16.msra.mxu0 %v570
      %656 = vmatprep.subr.bf16.mxu0 0
      %657 = vmatpush1.bf16.msra.mxu0 %v571
      %658 = vmatprep.subr.bf16.mxu0 0
      %659 = vmatpush1.bf16.msra.mxu0 %v572
      %660 = vmatprep.subr.bf16.mxu0 0
      %661 = vmatpush1.bf16.msra.mxu0 %v573
      %662 = vmatprep.mubr.bf16.mxu0 %v482
      %663 = vmatmul.mubr.bf16.gmra.mrb[0].mxu0 %v481
      %v664 = vpop.f32.mrb[0].mxu0
      %v665 = vadd.f32 0.0, %v664
      %v666 = vpop.f32.mrb[0].mxu0
      %v667 = vpop.f32.mrb[0].mxu0
      %v668 = vpop.f32.mrb[0].mxu0
      %669 = vdwg.mxu0
      %670 = vmatprep.subr.bf16.mxu0 0
      %671 = vmatpush1.bf16.msra.mxu0 %v558
      %672 = vmatprep.subr.bf16.mxu0 0
      %673 = vmatpush1.bf16.msra.mxu0 %v559
      %674 = vmatprep.subr.bf16.mxu0 0
      %675 = vmatpush1.bf16.msra.mxu0 %v560
      %676 = vmatprep.subr.bf16.mxu0 0
      %677 = vmatpush1.bf16.msra.mxu0 %v561
      %678 = vmatprep.subr.bf16.mxu0 0
      %679 = vmatpush1.bf16.msra.mxu0 %v562
      %680 = vmatprep.subr.bf16.mxu0 0
      %681 = vmatpush1.bf16.msra.mxu0 %v563
      %682 = vmatprep.subr.bf16.mxu0 0
      %683 = vmatpush1.bf16.msra.mxu0 %v564
      %684 = vmatprep.subr.bf16.mxu0 0
      %685 = vmatpush1.bf16.msra.mxu0 %v565
      %686 = vmatprep.subr.bf16.mxu0 0
      %687 = vmatpush1.bf16.msra.mxu0 %v566
      %688 = vmatprep.subr.bf16.mxu0 0
      %689 = vmatpush1.bf16.msra.mxu0 %v567
      %690 = vmatprep.subr.bf16.mxu0 0
      %691 = vmatpush1.bf16.msra.mxu0 %v568
      %692 = vmatprep.subr.bf16.mxu0 0
      %693 = vmatpush1.bf16.msra.mxu0 %v569
      %694 = vmatprep.subr.bf16.mxu0 0
      %695 = vmatpush1.bf16.msra.mxu0 %v570
      %696 = vmatprep.subr.bf16.mxu0 0
      %697 = vmatpush1.bf16.msra.mxu0 %v571
      %698 = vmatprep.subr.bf16.mxu0 0
      %699 = vmatpush1.bf16.msra.mxu0 %v572
      %700 = vmatprep.subr.bf16.mxu0 0
      %701 = vmatpush1.bf16.msra.mxu0 %v573
      %702 = vmatprep.mubr.bf16.mxu0 %v491
      %703 = vmatmul.mubr.bf16.gmra.mrb[0].mxu0 %v490
      %v704 = vpop.f32.mrb[0].mxu0
      %v705 = vadd.f32 0.0, %v704
      %v706 = vpop.f32.mrb[0].mxu0
      %v707 = vpop.f32.mrb[0].mxu0
      %v708 = vpop.f32.mrb[0].mxu0
      %709 = vdwg.mxu0
      %vm710 = vcmask 27648
      %v711 = vsel %vm710, %v625, 0.0
      %v712 = vrot.slane %v711, 4
      %v713 = vadd.f32 %v711, %v712
      %v714 = vrot.slane %v713, 2
      %v715 = vadd.f32 %v713, %v714
      %v716 = vrot.slane %v715, 1
      %v717 = vadd.f32 %v715, %v716
      %v718 = vsel %vm710, %v665, 0.0
      %v719 = vrot.slane %v718, 4
      %v720 = vadd.f32 %v718, %v719
      %v721 = vrot.slane %v720, 2
      %v722 = vadd.f32 %v720, %v721
      %v723 = vrot.slane %v722, 1
      %v724 = vadd.f32 %v722, %v723
      %v725 = vsel %vm710, %v705, 0.0
      %v726 = vrot.slane %v725, 4
      %v727 = vadd.f32 %v725, %v726
      %v728 = vrot.slane %v727, 2
      %v729 = vadd.f32 %v727, %v728
      %v730 = vrot.slane %v729, 1
      %v731 = vadd.f32 %v729, %v730
      %vm732 = vcmask 1040384
      %v733 = vsel %vm732, %v717, %v724
      %vm734 = vcmask 1041408
      %v735 = vsel %vm734, %v733, %v731
      %v736 = vld [vmem:[%s229] sm:$0x7]
      %v737 = vadd.f32 %v736, %v735
      %vm738 = vcmask 26624
      %739 = vst.msk [vmem:[%s229] sm:$0x7] %vm738, %v737
      %p740 = scmp.lt.s32.totalorder %s18, 1
      %s741 = scalar_select %p740, %s18, 1
      %s742 = smul.addr %s741, 4
      %s743 = scalar_lea.vmem %s3, %s742
      // Predicated region
      $region37: #{dice_score.1} parent=31 // pred_check
        %p744 = pneg %p121
      $region38: #{dice_score.1} parent=31 // pred_check_branch
        %746 = sbr.rel (%p744) target = $region40
      $region39: #{dice_score.1} parent=31 // pred_region
        _
      $region40: #{dice_score.1} parent=31 // pred_fallthru
        _
    $region32: #{dice_score.1} parent=5 // pred_fallthru
      _
    %p747 = scmp.le.s32.totalorder 2, %s9
    // Predicated region
    $region41: #{dice_score.1} parent=5 // pred_check
      %p748 = pneg %p747
    $region42: #{dice_score.1} parent=5 // pred_check_branch
      %750 = sbr.rel (%p748) target = $region44
    $region43: #{dice_score.1} parent=5 // pred_region
      %s751 = ssub.s32 %s9, 2
      // Predicated region
      $region45: #{dice_score.1} parent=43 // pred_check
        %p752 = pneg %p127
      $region46: #{dice_score.1} parent=43 // pred_check_branch
        %754 = sbr.rel (%p752) target = $region48
      $region47: #{dice_score.1} parent=43 // pred_region
        %p755 = scmp.lt.s32.totalorder %s20, 1
        %s756 = scalar_select %p755, %s20, 1
        %s757 = smul.addr %s756, 4
        %s758 = scalar_lea.vmem %s3, %s757
      $region48: #{dice_score.1} parent=43 // pred_fallthru
        _
    $region44: #{dice_score.1} parent=5 // pred_fallthru
      _
  $region6: #{dice_score.1} parent=0 // loop_footer
    %s13 = sadd.s32 1, %s9
  $region7: #{dice_score.1} parent=0 // loop_footer_branch
    %8 = sbr.rel target = $region3
  $region8: #{dice_score.1} parent=0 // loop_exit
    _

</llo_original>
